<compile_context>
chip_gen: v6e
topology: v6e:2x2x1
jax: 0.10.0
libtpu: 0.0.40
codegen_flags: <defaults>
</compile_context>

<pallas_src>
import numpy as np
import jax
import jax.numpy as jnp
from jax.experimental import pallas as pl
from jax.experimental.pallas import tpu as pltpu


def diffusion_kernel(params_ref, wbd_ref, x0_ref, nz_ref,
                     loss_ref, xt_ref, out_ref):
    # params_ref: VMEM (ROWS, 4)    per-row [sqrt_ab[t_b], sqrt_1m_ab[t_b], bias+temb, 0]
    # wbd_ref   : VMEM (ROWS, ROWS) block-diagonal kron(I_B, W) weight (shared block)
    # x0_ref    : VMEM (ROWS, LT)
    # nz_ref    : VMEM (ROWS, LT)
    a = params_ref[:, 0:1]          # (ROWS, 1) -> lane-broadcast
    s = params_ref[:, 1:2]
    bv = params_ref[:, 2:3]

    x0 = x0_ref[...]                # (ROWS, LT), fully dense
    nz = nz_ref[...]

    # forward diffusion (Algorithm 1) -- pure VPU, lane/sublane dense
    x_t = a * x0 + s * nz
    xt_ref[...] = x_t

    # synthetic "UNet": per-batch 1x1 conv over channels + time-conditioned bias,
    # done as ONE block-diagonal matmul covering the whole batch per lane tile.
    unet = jnp.dot(wbd_ref[...], x_t, preferred_element_type=jnp.float32) + bv
    out_ref[...] = unet

    # F.mse_loss(unet_out, noise, reduction='none')
    loss_ref[...] = (unet - nz) ** 2


def gaussian_diffusion_trainer(x_0, key, *, beta_1, beta_T, T, high,
                               w, bias, temb_table):
    """Returns (loss, x_t, unet_out), all shaped like x_0 (NCHW)."""
    B, C, H, W = x_0.shape
    HW = H * W
    ROWS = B * C

    # --- diffusion buffers (match torch: linspace in double, cumprod, sqrt, .float())
    betas = np.linspace(beta_1, beta_T, T, dtype=np.float64)
    alphas = 1.0 - betas
    alphas_bar = np.cumprod(alphas)
    sqrt_alphas_bar = jnp.asarray(np.sqrt(alphas_bar), dtype=jnp.float32)
    sqrt_one_minus_alphas_bar = jnp.asarray(np.sqrt(1.0 - alphas_bar),
                                            dtype=jnp.float32)

    # --- per-call randomness (t, noise) done in plain JAX glue ---
    k_t, k_n = jax.random.split(key)
    t = jax.random.randint(k_t, (B,), 0, T)
    noise = jax.random.normal(k_n, x_0.shape, dtype=jnp.float32)
    if high:
        noise = -jnp.abs(noise)
    # TODO(synk): `bg = torch.ones_like(noise)` is computed but unused in the
    # original forward; omitted here.

    # --- pack per-row params, row r = b*C + c: [a, s, bias+temb, pad] ---
    a_rows = jnp.repeat(sqrt_alphas_bar[t], C)                  # (ROWS,)
    s_rows = jnp.repeat(sqrt_one_minus_alphas_bar[t], C)        # (ROWS,)
    bv_rows = (bias[None, :] + temb_table[t]).reshape(ROWS)     # (ROWS,)
    params = jnp.stack(
        [a_rows, s_rows, bv_rows, jnp.zeros_like(a_rows)], axis=1
    ).astype(jnp.float32)                                       # (ROWS, 4)

    # block-diagonal weight: one matmul mixes channels for the whole batch
    w_bd = jnp.kron(jnp.eye(B, dtype=jnp.float32),
                    w.astype(jnp.float32))                      # (ROWS, ROWS)

    # lane/sublane-dense 2D slabs
    x0_rows = x_0.reshape(ROWS, HW).astype(jnp.float32)
    nz_rows = noise.reshape(ROWS, HW)

    # --- lane tiling: multiple of 128, divides HW, >=2 grid steps when possible
    #     (v7x has 2 TensorCores), and per-step blocks kept <= ~2 MiB/array so
    #     double-buffered VMEM stays comfortably under every generation's limit.
    if HW % 256 == 0:
        lane_tile = HW // 2
        while (ROWS * lane_tile * 4 > (2 << 20)
               and (lane_tile // 2) % 128 == 0 and HW % (lane_tile // 2) == 0):
            lane_tile //= 2
    else:
        lane_tile = HW  # full-extent block (always legal)
    grid = (HW // lane_tile,)

    tiled = lambda j: (0, j)
    shared = lambda j: (0, 0)

    out_shapes = (
        jax.ShapeDtypeStruct((ROWS, HW), jnp.float32),  # loss
        jax.ShapeDtypeStruct((ROWS, HW), jnp.float32),  # x_t
        jax.ShapeDtypeStruct((ROWS, HW), jnp.float32),  # unet_out
    )

    grid_spec = pltpu.PrefetchScalarGridSpec(
        num_scalar_prefetch=0,
        grid=grid,
        in_specs=[
            pl.BlockSpec((ROWS, 4), shared),            # packed per-row params
            pl.BlockSpec((ROWS, ROWS), shared),         # block-diagonal weight
            pl.BlockSpec((ROWS, lane_tile), tiled),     # x_0 slab
            pl.BlockSpec((ROWS, lane_tile), tiled),     # noise slab
        ],
        out_specs=[
            pl.BlockSpec((ROWS, lane_tile), tiled),     # loss
            pl.BlockSpec((ROWS, lane_tile), tiled),     # x_t
            pl.BlockSpec((ROWS, lane_tile), tiled),     # unet_out
        ],
    )

    loss, x_t, unet = pl.pallas_call(
        diffusion_kernel,
        out_shape=out_shapes,
        grid_spec=grid_spec,
        compiler_params=pltpu.CompilerParams(
            dimension_semantics=("parallel",)),
    )(params, w_bd, x0_rows, nz_rows)

    return (loss.reshape(B, C, H, W),
            x_t.reshape(B, C, H, W),
            unet.reshape(B, C, H, W))


if __name__ == "__main__":
    key = jax.random.PRNGKey(0)
    B, C, H, W = 2, 4, 16, 16
    T = 100
    beta_1, beta_T = 1e-4, 0.02

    k_x, k_w, k_b, k_e, k_fwd = jax.random.split(key, 5)
    x_0 = jax.random.normal(k_x, (B, C, H, W), dtype=jnp.float32)

    # deterministic synthetic "model" parameters (stand-in for the injected UNet)
    w = 0.1 * jax.random.normal(k_w, (C, C), dtype=jnp.float32)
    bias = 0.1 * jax.random.normal(k_b, (C,), dtype=jnp.float32)
    temb_table = 0.1 * jax.random.normal(k_e, (T, C), dtype=jnp.float32)

    loss, x_t, unet_out = gaussian_diffusion_trainer(
        x_0, k_fwd, beta_1=beta_1, beta_T=beta_T, T=T, high=False,
        w=w, bias=bias, temb_table=temb_table)
    jax.block_until_ready((loss, x_t, unet_out))

    assert loss.shape == (B, C, H, W)
    assert x_t.shape == (B, C, H, W)
    assert unet_out.shape == (B, C, H, W)

    # --- pure-JAX reference (same randomness) for a correctness sanity check ---
    betas_np = np.linspace(beta_1, beta_T, T, dtype=np.float64)
    ab_np = np.cumprod(1.0 - betas_np)
    sab = jnp.asarray(np.sqrt(ab_np), jnp.float32)
    somab = jnp.asarray(np.sqrt(1.0 - ab_np), jnp.float32)
    k_t, k_n = jax.random.split(k_fwd)
    t_ref = jax.random.randint(k_t, (B,), 0, T)
    noise_ref = jax.random.normal(k_n, x_0.shape, dtype=jnp.float32)
    a_ref = sab[t_ref].reshape(B, 1, 1, 1)
    s_ref = somab[t_ref].reshape(B, 1, 1, 1)
    x_t_ref = a_ref * x_0 + s_ref * noise_ref
    unet_ref = (jnp.einsum('oc,bchw->bohw', w, x_t_ref)
                + (bias[None, :] + temb_table[t_ref])[:, :, None, None])
    loss_ref = (unet_ref - noise_ref) ** 2

    assert bool(jnp.allclose(x_t, x_t_ref, rtol=1e-2, atol=1e-2))
    assert bool(jnp.allclose(unet_out, unet_ref, rtol=1e-2, atol=1e-2))
    assert bool(jnp.allclose(loss, loss_ref, rtol=1e-2, atol=1e-2))

    print("KERNEL_OK")
</pallas_src>

<mosaic_0001>
module attributes {stable_mosaic.version = 11 : i64} {
  func.func @diffusion_kernel(%arg0: i32, %arg1: memref<8x4xf32, #tpu.memory_space<vmem>>, %arg2: memref<8x8xf32, #tpu.memory_space<vmem>>, %arg3: memref<8x128xf32, #tpu.memory_space<vmem>>, %arg4: memref<8x128xf32, #tpu.memory_space<vmem>>, %arg5: memref<8x128xf32, #tpu.memory_space<vmem>>, %arg6: memref<8x128xf32, #tpu.memory_space<vmem>>, %arg7: memref<8x128xf32, #tpu.memory_space<vmem>>) attributes {dimension_semantics = [#tpu.dimension_semantics<parallel>], iteration_bounds = array<i64: 2>, scalar_prefetch = 0 : i64, scratch_operands = 0 : i64, tpu.core_type = #tpu.core_type<tc>, window_params = [{pipeline_mode = #tpu.pipeline_mode<synchronous>, transform_indices = @transform_0, window_bounds = array<i64: 8, 4>}, {pipeline_mode = #tpu.pipeline_mode<synchronous>, transform_indices = @transform_1, window_bounds = array<i64: 8, 8>}, {transform_indices = @transform_2, window_bounds = array<i64: 8, 128>}, {transform_indices = @transform_3, window_bounds = array<i64: 8, 128>}, {transform_indices = @transform_4, window_bounds = array<i64: 8, 128>}, {transform_indices = @transform_5, window_bounds = array<i64: 8, 128>}, {transform_indices = @transform_6, window_bounds = array<i64: 8, 128>}]} {
    %c0 = arith.constant 0 : index
    %c0_0 = arith.constant 0 : index
    %0 = vector.load %arg1[%c0, %c0_0] : memref<8x4xf32, #tpu.memory_space<vmem>>, vector<8x1xf32>
    %c0_1 = arith.constant 0 : index
    %c1 = arith.constant 1 : index
    %1 = vector.load %arg1[%c0_1, %c1] : memref<8x4xf32, #tpu.memory_space<vmem>>, vector<8x1xf32>
    %c0_2 = arith.constant 0 : index
    %c2 = arith.constant 2 : index
    %2 = vector.load %arg1[%c0_2, %c2] : memref<8x4xf32, #tpu.memory_space<vmem>>, vector<8x1xf32>
    %c0_3 = arith.constant 0 : index
    %c0_4 = arith.constant 0 : index
    %3 = vector.load %arg3[%c0_3, %c0_4] : memref<8x128xf32, #tpu.memory_space<vmem>>, vector<8x128xf32>
    %c0_5 = arith.constant 0 : index
    %c0_6 = arith.constant 0 : index
    %4 = vector.load %arg4[%c0_5, %c0_6] : memref<8x128xf32, #tpu.memory_space<vmem>>, vector<8x128xf32>
    %5 = vector.broadcast %0 : vector<8x1xf32> to vector<8x128xf32>
    %6 = arith.mulf %5, %3 : vector<8x128xf32>
    %7 = vector.broadcast %1 : vector<8x1xf32> to vector<8x128xf32>
    %8 = arith.mulf %7, %4 : vector<8x128xf32>
    %9 = arith.addf %6, %8 : vector<8x128xf32>
    %c0_7 = arith.constant 0 : index
    %c0_8 = arith.constant 0 : index
    %10 = vector.load %arg6[%c0_7, %c0_8] : memref<8x128xf32, #tpu.memory_space<vmem>>, vector<8x128xf32>
    tpu.vector_store %arg6[%c0_7, %c0_8], %9 {strides = array<i32>} : memref<8x128xf32, #tpu.memory_space<vmem>>, vector<8x128xf32>,
    %c0_9 = arith.constant 0 : index
    %c0_10 = arith.constant 0 : index
    %11 = vector.load %arg2[%c0_9, %c0_10] : memref<8x8xf32, #tpu.memory_space<vmem>>, vector<8x8xf32>
    %cst = arith.constant dense<0.000000e+00> : vector<8x128xf32>
    %12 = tpu.matmul %11, %9, %cst {dimension_numbers = #tpu.dot_dimension_numbers<[1], [0], [0], [1], [0, 0, 1, 1], [], []>} : vector<8x8xf32>, vector<8x128xf32>, vector<8x128xf32> -> vector<8x128xf32>
    %13 = vector.broadcast %2 : vector<8x1xf32> to vector<8x128xf32>
    %14 = arith.addf %12, %13 : vector<8x128xf32>
    %c0_11 = arith.constant 0 : index
    %c0_12 = arith.constant 0 : index
    %15 = vector.load %arg7[%c0_11, %c0_12] : memref<8x128xf32, #tpu.memory_space<vmem>>, vector<8x128xf32>
    tpu.vector_store %arg7[%c0_11, %c0_12], %14 {strides = array<i32>} : memref<8x128xf32, #tpu.memory_space<vmem>>, vector<8x128xf32>,
    %16 = arith.subf %14, %4 : vector<8x128xf32>
    %17 = arith.mulf %16, %16 : vector<8x128xf32>
    %c0_13 = arith.constant 0 : index
    %c0_14 = arith.constant 0 : index
    %18 = vector.load %arg5[%c0_13, %c0_14] : memref<8x128xf32, #tpu.memory_space<vmem>>, vector<8x128xf32>
    tpu.vector_store %arg5[%c0_13, %c0_14], %17 {strides = array<i32>} : memref<8x128xf32, #tpu.memory_space<vmem>>, vector<8x128xf32>,
    return
  }
  func.func @transform_0(%arg0: i32) -> (i32, i32) {
    %c0_i32 = arith.constant 0 : i32
    %c0_i32_0 = arith.constant 0 : i32
    %c0_i32_1 = arith.constant 0 : i32
    return %c0_i32, %c0_i32_0 : i32, i32
  }
  func.func @transform_1(%arg0: i32) -> (i32, i32) {
    %c0_i32 = arith.constant 0 : i32
    %c0_i32_0 = arith.constant 0 : i32
    %c0_i32_1 = arith.constant 0 : i32
    return %c0_i32, %c0_i32_0 : i32, i32
  }
  func.func @transform_2(%arg0: i32) -> (i32, i32) {
    %c0_i32 = arith.constant 0 : i32
    %c0_i32_0 = arith.constant 0 : i32
    return %c0_i32, %arg0 : i32, i32
  }
  func.func @transform_3(%arg0: i32) -> (i32, i32) {
    %c0_i32 = arith.constant 0 : i32
    %c0_i32_0 = arith.constant 0 : i32
    return %c0_i32, %arg0 : i32, i32
  }
  func.func @transform_4(%arg0: i32) -> (i32, i32) {
    %c0_i32 = arith.constant 0 : i32
    %c0_i32_0 = arith.constant 0 : i32
    return %c0_i32, %arg0 : i32, i32
  }
  func.func @transform_5(%arg0: i32) -> (i32, i32) {
    %c0_i32 = arith.constant 0 : i32
    %c0_i32_0 = arith.constant 0 : i32
    return %c0_i32, %arg0 : i32, i32
  }
  func.func @transform_6(%arg0: i32) -> (i32, i32) {
    %c0_i32 = arith.constant 0 : i32
    %c0_i32_0 = arith.constant 0 : i32
    return %c0_i32, %arg0 : i32, i32
  }
}

</mosaic_0001>

<llo_original>
// kernel: tpu_custom_call.1
$region0: #{tpu_custom_call.1}
  #allocation0 [shape = 'u32[]', space=smem, size = 0x4, offset = 0x4, fixed_abs, tag = 'smem constant byte address 0x4 - core index']
  #allocation1 [shape = 'u32[144,128]{1,0:T(1,128)}', space=vmem, size = 0x12000, scoped, tag = 'internal scratch']
  %s0 = inlined_call_operand.vmem [shape: f32[8,4], index: 0, kind: input, shape index: {}]
  %s1 = inlined_call_operand.hbm [shape: f32[8,8], index: 1, kind: input, shape index: {}]
  %s2 = inlined_call_operand.hbm [shape: f32[8,256], index: 2, kind: input, shape index: {}]
  %s3 = inlined_call_operand.vmem [shape: f32[8,256], index: 3, kind: input, shape index: {}]
  %s4 = inlined_call_operand.hbm [shape: f32[8,256], index: 4, kind: output, shape index: {0}]
  %s5 = inlined_call_operand.hbm [shape: f32[8,256], index: 5, kind: output, shape index: {1}]
  %s6 = inlined_call_operand.hbm [shape: f32[8,256], index: 6, kind: output, shape index: {2}]
  %7 = xla_tuple %s4, %s5, %s6
  %s8 = sld [smem:[#allocation0]]
  $region73: #{tpu_custom_call.1} parent=0
    _
  %s10 = ssub.s32 1, %s8
  %s11 = scalar_select 0, %s10, %s8
  $region1: #{tpu_custom_call.1} parent=0
    #allocation2 [shape = 'u8[4096]{0}', space=vmem, size = 0x1000, scoped, tag = 'input window, operand 1, single buffered']
    #allocation3 [shape = 's32[2]{0}', space=sflag, size = 0x8, scoped, tag = 'scoped memory for tpu_custom_call.1']
    #allocation4 [shape = 's32[2]{0}', space=sflag, size = 0x8, scoped, tag = 'scoped memory for tpu_custom_call.1']
    #allocation5 [shape = 'u8[8192]{0}', space=vmem, size = 0x2000, scoped, tag = 'input window, operand 2']
    #allocation6 [shape = 's32[2]{0}', space=sflag, size = 0x8, scoped, tag = 'scoped memory for tpu_custom_call.1']
    #allocation7 [shape = 'u8[8192]{0}', space=vmem, size = 0x2000, scoped, tag = 'output window, operand 0']
    #allocation8 [shape = 'u8[8192]{0}', space=vmem, size = 0x2000, scoped, tag = 'output window, operand 1']
    #allocation9 [shape = 's32[2]{0}', space=sflag, size = 0x8, scoped, tag = 'scoped memory for tpu_custom_call.1']
    #allocation10 [shape = 'u8[8192]{0}', space=vmem, size = 0x2000, scoped, tag = 'output window, operand 2']
    %12 = vsyncpa [#allocation3], 0
    %13 = vsyncpa [#allocation6], 0
    %s14 = scalar_lea.sflag [#allocation6], 1
    %15 = vsyncpa %s14, 0
    %16 = vsyncpa [#allocation4], 0
    %s17 = scalar_lea.sflag [#allocation4], 1
    %18 = vsyncpa %s17, 0
    %19 = vsyncpa [#allocation9], 0
    %s20 = scalar_lea.sflag [#allocation9], 1
    %21 = vsyncpa %s20, 0
    loop: start=0, step=1, limit=4
    $region2: #{tpu_custom_call.1} parent=1 // loop_pre_header
      _
    $region3: #{tpu_custom_call.1} parent=1 // loop_header
      %s23 = sphi 0, %s27
      %p24 = scmp.ge.s32.totalorder %s23, 4
      %s31 = sphi 0, %s31
      %s33 = sphi 0, %s31
      %s34 = sphi 0, %s33
      %s48 = sphi 0, %s34
      %s52 = sphi 0, %s52
      %s54 = sphi 0, %s52
      %s55 = sphi 0, %s54
      %s69 = sphi 0, %s55
      %s75 = sphi 0, %s77
      %s78 = sphi 0, %s75
      %s79 = sphi 0, %s78
      %s95 = sphi 0, %s79
      %s101 = sphi 0, %s103
      %s104 = sphi 0, %s101
      %s105 = sphi 0, %s104
      %s121 = sphi 0, %s105
      %s127 = sphi 0, %s129
      %s130 = sphi 0, %s127
      %s131 = sphi 0, %s130
      %s147 = sphi 0, %s131
      %s153 = sphi 0, %s155
      %s156 = sphi 0, %s153
      %s157 = sphi 0, %s156
      %s173 = sphi 0, %s157
      %s179 = sphi 0, %s181
      %s182 = sphi 0, %s179
      %s183 = sphi 0, %s182
      %s199 = sphi 0, %s183
    $region4: #{tpu_custom_call.1} parent=1 // loop_header_branch
      %26 = sbr.rel (%p24) target = $region8
    $region5: #{tpu_custom_call.1} parent=1 // loop_body
      %s28 = ssub.s32 %s23, 1
      %s29 = ssub.s32 %s23, 2
      %s30 = sadd.s32 %s23, 1
      %s32 = sadd.s32 %s31, 1
      %p35 = scmp.eq.s32.totalorder %s23, 1
      %p36 = scmp.ne.s32.totalorder %s31, %s33
      %p37 = scmp.eq.s32.totalorder %s23, 0
      %p38 = por %p36, %p37
      %p39 = scmp.ne.s32.totalorder %s31, %s33
      %p40 = scmp.eq.s32.totalorder %s28, 1
      %p41 = por %p39, %p40
      %p42 = scmp.ne.s32.totalorder %s33, %s34
      %p43 = scmp.eq.s32.totalorder %s28, 0
      %p44 = por %p42, %p43
      %p45 = scmp.ne.s32.totalorder %s33, %s34
      %p46 = scmp.eq.s32.totalorder %s29, 1
      %p47 = por %p45, %p46
      %p49 = scmp.ne.s32.totalorder %s34, %s48
      %p50 = scmp.eq.s32.totalorder %s29, 0
      %p51 = por %p49, %p50
      %s53 = sadd.s32 %s52, 1
      %p56 = scmp.eq.s32.totalorder %s23, 1
      %p57 = scmp.ne.s32.totalorder %s52, %s54
      %p58 = scmp.eq.s32.totalorder %s23, 0
      %p59 = por %p57, %p58
      %p60 = scmp.ne.s32.totalorder %s52, %s54
      %p61 = scmp.eq.s32.totalorder %s28, 1
      %p62 = por %p60, %p61
      %p63 = scmp.ne.s32.totalorder %s54, %s55
      %p64 = scmp.eq.s32.totalorder %s28, 0
      %p65 = por %p63, %p64
      %p66 = scmp.ne.s32.totalorder %s54, %s55
      %p67 = scmp.eq.s32.totalorder %s29, 1
      %p68 = por %p66, %p67
      %p70 = scmp.ne.s32.totalorder %s55, %s69
      %p71 = scmp.eq.s32.totalorder %s29, 0
      %p72 = por %p70, %p71
      %s73 = ssub.s32 %s23, %s30
      %p74 = scmp.eq.s32.totalorder %s73, 0
      %s76 = sadd.s32 %s75, 1
      %s77 = scalar_select %p74, %s75, %s76
      %p80 = pneg %p74
      %p81 = scmp.eq.s32.totalorder %s23, 1
      %p82 = por %p80, %p81
      %p83 = scmp.ne.s32.totalorder %s75, %s78
      %p84 = scmp.eq.s32.totalorder %s23, 0
      %p85 = por %p83, %p84
      %p86 = scmp.ne.s32.totalorder %s75, %s78
      %p87 = scmp.eq.s32.totalorder %s28, 1
      %p88 = por %p86, %p87
      %p89 = scmp.ne.s32.totalorder %s78, %s79
      %p90 = scmp.eq.s32.totalorder %s28, 0
      %p91 = por %p89, %p90
      %p92 = scmp.ne.s32.totalorder %s78, %s79
      %p93 = scmp.eq.s32.totalorder %s29, 1
      %p94 = por %p92, %p93
      %p96 = scmp.ne.s32.totalorder %s79, %s95
      %p97 = scmp.eq.s32.totalorder %s29, 0
      %p98 = por %p96, %p97
      %s99 = ssub.s32 %s23, %s30
      %p100 = scmp.eq.s32.totalorder %s99, 0
      %s102 = sadd.s32 %s101, 1
      %s103 = scalar_select %p100, %s101, %s102
      %p106 = pneg %p100
      %p107 = scmp.eq.s32.totalorder %s23, 1
      %p108 = por %p106, %p107
      %p109 = scmp.ne.s32.totalorder %s101, %s104
      %p110 = scmp.eq.s32.totalorder %s23, 0
      %p111 = por %p109, %p110
      %p112 = scmp.ne.s32.totalorder %s101, %s104
      %p113 = scmp.eq.s32.totalorder %s28, 1
      %p114 = por %p112, %p113
      %p115 = scmp.ne.s32.totalorder %s104, %s105
      %p116 = scmp.eq.s32.totalorder %s28, 0
      %p117 = por %p115, %p116
      %p118 = scmp.ne.s32.totalorder %s104, %s105
      %p119 = scmp.eq.s32.totalorder %s29, 1
      %p120 = por %p118, %p119
      %p122 = scmp.ne.s32.totalorder %s105, %s121
      %p123 = scmp.eq.s32.totalorder %s29, 0
      %p124 = por %p122, %p123
      %s125 = ssub.s32 %s23, %s30
      %p126 = scmp.eq.s32.totalorder %s125, 0
      %s128 = sadd.s32 %s127, 1
      %s129 = scalar_select %p126, %s127, %s128
      %p132 = pneg %p126
      %p133 = scmp.eq.s32.totalorder %s23, 1
      %p134 = por %p132, %p133
      %p135 = scmp.ne.s32.totalorder %s127, %s130
      %p136 = scmp.eq.s32.totalorder %s23, 0
      %p137 = por %p135, %p136
      %p138 = scmp.ne.s32.totalorder %s127, %s130
      %p139 = scmp.eq.s32.totalorder %s28, 1
      %p140 = por %p138, %p139
      %p141 = scmp.ne.s32.totalorder %s130, %s131
      %p142 = scmp.eq.s32.totalorder %s28, 0
      %p143 = por %p141, %p142
      %p144 = scmp.ne.s32.totalorder %s130, %s131
      %p145 = scmp.eq.s32.totalorder %s29, 1
      %p146 = por %p144, %p145
      %p148 = scmp.ne.s32.totalorder %s131, %s147
      %p149 = scmp.eq.s32.totalorder %s29, 0
      %p150 = por %p148, %p149
      %s151 = ssub.s32 %s23, %s30
      %p152 = scmp.eq.s32.totalorder %s151, 0
      %s154 = sadd.s32 %s153, 1
      %s155 = scalar_select %p152, %s153, %s154
      %p158 = pneg %p152
      %p159 = scmp.eq.s32.totalorder %s23, 1
      %p160 = por %p158, %p159
      %p161 = scmp.ne.s32.totalorder %s153, %s156
      %p162 = scmp.eq.s32.totalorder %s23, 0
      %p163 = por %p161, %p162
      %p164 = scmp.ne.s32.totalorder %s153, %s156
      %p165 = scmp.eq.s32.totalorder %s28, 1
      %p166 = por %p164, %p165
      %p167 = scmp.ne.s32.totalorder %s156, %s157
      %p168 = scmp.eq.s32.totalorder %s28, 0
      %p169 = por %p167, %p168
      %p170 = scmp.ne.s32.totalorder %s156, %s157
      %p171 = scmp.eq.s32.totalorder %s29, 1
      %p172 = por %p170, %p171
      %p174 = scmp.ne.s32.totalorder %s157, %s173
      %p175 = scmp.eq.s32.totalorder %s29, 0
      %p176 = por %p174, %p175
      %s177 = ssub.s32 %s23, %s30
      %p178 = scmp.eq.s32.totalorder %s177, 0
      %s180 = sadd.s32 %s179, 1
      %s181 = scalar_select %p178, %s179, %s180
      %p184 = pneg %p178
      %p185 = scmp.eq.s32.totalorder %s23, 1
      %p186 = por %p184, %p185
      %p187 = scmp.ne.s32.totalorder %s179, %s182
      %p188 = scmp.eq.s32.totalorder %s23, 0
      %p189 = por %p187, %p188
      %p190 = scmp.ne.s32.totalorder %s179, %s182
      %p191 = scmp.eq.s32.totalorder %s28, 1
      %p192 = por %p190, %p191
      %p193 = scmp.ne.s32.totalorder %s182, %s183
      %p194 = scmp.eq.s32.totalorder %s28, 0
      %p195 = por %p193, %p194
      %p196 = scmp.ne.s32.totalorder %s182, %s183
      %p197 = scmp.eq.s32.totalorder %s29, 1
      %p198 = por %p196, %p197
      %p200 = scmp.ne.s32.totalorder %s183, %s199
      %p201 = scmp.eq.s32.totalorder %s29, 0
      %p202 = por %p200, %p201
      %p203 = scmp.le.s32.totalorder 1, %s23
      %p204 = scmp.lt.s32.totalorder %s23, 3
      %p205 = pnand %p203, %p204
      %p206 = pneg %p205
      // Predicated region
      $region9: #{tpu_custom_call.1} parent=5 // pred_check
        _
      $region10: #{tpu_custom_call.1} parent=5 // pred_check_branch
        %208 = sbr.rel (%p205) target = $region12
      $region11: #{tpu_custom_call.1} parent=5 // pred_region
        %s209 = ssub.s32 %s23, 1
        // Predicated region
        $region13: #{tpu_custom_call.1} parent=11 // pred_check
          %p210 = pneg %p44
        $region14: #{tpu_custom_call.1} parent=11 // pred_check_branch
          %212 = sbr.rel (%p210) target = $region16
        $region15: #{tpu_custom_call.1} parent=11 // pred_region
          _
        $region16: #{tpu_custom_call.1} parent=11 // pred_fallthru
          _
        // Predicated region
        $region17: #{tpu_custom_call.1} parent=11 // pred_check
          %p213 = pneg %p65
        $region18: #{tpu_custom_call.1} parent=11 // pred_check_branch
          %215 = sbr.rel (%p213) target = $region20
        $region19: #{tpu_custom_call.1} parent=11 // pred_region
          %s217 = ssub.s32 128, 128
          %218 = vsyncadd [#allocation3], %s217
          %s220 = sshll.u32 [#allocation2], 4
          %s221 = int_to_ptr.vmem [resolvable:$true] %s220
          %223 = dma.hbm_to_vmem [thread:$0]  %s1, 128, %s221, [#allocation3]
        $region20: #{tpu_custom_call.1} parent=11 // pred_fallthru
          _
      $region12: #{tpu_custom_call.1} parent=5 // pred_fallthru
        _
      %p224 = scmp.lt.s32.totalorder %s23, 2
      // Predicated region
      $region21: #{tpu_custom_call.1} parent=5 // pred_check
        %p225 = pneg %p224
      $region22: #{tpu_custom_call.1} parent=5 // pred_check_branch
        %227 = sbr.rel (%p225) target = $region24
      $region23: #{tpu_custom_call.1} parent=5 // pred_region
        // Predicated region
        $region25: #{tpu_custom_call.1} parent=23 // pred_check
          %p228 = pneg %p85
        $region26: #{tpu_custom_call.1} parent=23 // pred_check_branch
          %230 = sbr.rel (%p228) target = $region28
        $region27: #{tpu_custom_call.1} parent=23 // pred_region
          %s231 = sand.u32 %s75, 1
          %s232 = scalar_lea.sflag [#allocation6], %s231
          %s233 = sand.u32 %s75, 1
          %s234 = smul.addr %s233, 8
          %s235 = scalar_lea.vmem [#allocation5], %s234
          %s237 = ssub.s32 128, 128
          %238 = vsyncadd %s232, %s237
          %s239 = smul.addr %s23, 128
          %s240 = scalar_lea.hbm %s2, %s239
          %s242 = sshll.u32 %s235, 4
          %s243 = int_to_ptr.vmem [resolvable:$true] %s242
          %245 = dma.hbm_to_vmem [thread:$0]  %s240, 128, %s243, %s232
        $region28: #{tpu_custom_call.1} parent=23 // pred_fallthru
          _
        // Predicated region
        $region29: #{tpu_custom_call.1} parent=23 // pred_check
          %p246 = pneg %p111
        $region30: #{tpu_custom_call.1} parent=23 // pred_check_branch
          %248 = sbr.rel (%p246) target = $region32
        $region31: #{tpu_custom_call.1} parent=23 // pred_region
          %p249 = scmp.lt.s32.totalorder %s23, 1
          %s250 = scalar_select %p249, %s23, 1
          %s251 = smul.addr %s250, 8
          %s252 = scalar_lea.vmem %s3, %s251
        $region32: #{tpu_custom_call.1} parent=23 // pred_fallthru
          _
      $region24: #{tpu_custom_call.1} parent=5 // pred_fallthru
        _
      %p253 = scmp.le.s32.totalorder 1, %s23
      %p254 = scmp.lt.s32.totalorder %s23, 3
      %p255 = pnand %p253, %p254
      %p256 = pneg %p255
      // Predicated region
      $region33: #{tpu_custom_call.1} parent=5 // pred_check
        _
      $region34: #{tpu_custom_call.1} parent=5 // pred_check_branch
        %258 = sbr.rel (%p255) target = $region36
      $region35: #{tpu_custom_call.1} parent=5 // pred_region
        %s259 = ssub.s32 %s23, 1
        // Predicated region
        $region37: #{tpu_custom_call.1} parent=35 // pred_check
          %p260 = pneg %p65
        $region38: #{tpu_custom_call.1} parent=35 // pred_check_branch
          %262 = sbr.rel (%p260) target = $region40
        $region39: #{tpu_custom_call.1} parent=35 // pred_region
          %263 = dma.done [#allocation3], 128
        $region40: #{tpu_custom_call.1} parent=35 // pred_fallthru
          _
        %s264 = sand.u32 %s78, 1
        %s265 = scalar_lea.sflag [#allocation6], %s264
        %s266 = sand.u32 %s78, 1
        %s267 = smul.addr %s266, 8
        %s268 = scalar_lea.vmem [#allocation5], %s267
        // Predicated region
        $region41: #{tpu_custom_call.1} parent=35 // pred_check
          %p269 = pneg %p91
        $region42: #{tpu_custom_call.1} parent=35 // pred_check_branch
          %271 = sbr.rel (%p269) target = $region44
        $region43: #{tpu_custom_call.1} parent=35 // pred_region
          %272 = dma.done %s265, 128
        $region44: #{tpu_custom_call.1} parent=35 // pred_fallthru
          _
        %p273 = pneg %p44
        %p274 = pneg %p41
        %p275 = pneg %p65
        %p276 = pneg %p62
        %s277 = sand.u32 %s78, 1
        %s278 = scalar_lea.sflag [#allocation6], %s277
        %s279 = sand.u32 %s78, 1
        %s280 = smul.addr %s279, 8
        %s281 = scalar_lea.vmem [#allocation5], %s280
        %p282 = pneg %p91
        %p283 = pneg %p88
        %p284 = scmp.lt.s32.totalorder %s28, 1
        %s285 = scalar_select %p284, %s28, 1
        %s286 = smul.addr %s285, 8
        %s287 = scalar_lea.vmem %s3, %s286
        %p288 = pneg %p117
        %p289 = pneg %p114
        %p290 = pneg %p143
        %p291 = pneg %p140
        %s292 = sand.u32 %s130, 1
        %s293 = scalar_lea.sflag [#allocation4], %s292
        %s294 = sand.u32 %s130, 1
        %s295 = smul.addr %s294, 8
        %s296 = scalar_lea.vmem [#allocation7], %s295
        %p297 = pneg %p169
        %p298 = pneg %p166
        %s299 = sand.u32 %s28, 1
        %s300 = scalar_lea.sflag [#allocation9], %s299
        %s301 = sand.u32 %s156, 1
        %s302 = smul.addr %s301, 8
        %s303 = scalar_lea.vmem [#allocation8], %s302
        %p304 = pneg %p195
        %p305 = pneg %p192
        %s306 = sand.u32 %s28, 1
        %s307 = scalar_lea.sflag [#allocation9], %s306
        %s308 = sand.u32 %s182, 1
        %s309 = smul.addr %s308, 8
        %s310 = scalar_lea.vmem [#allocation10], %s309
        %p311 = scmp.lt.s32.totalorder %s28, 1
        %s312 = scalar_select %p311, %s28, 1
        %s313 = smul.addr %s312, 8
        %s314 = scalar_lea.vmem %s3, %s313
        %v315 = vld [vmem:[%s0] sm:$0xff]
        %v316 = vld [vmem:[%s268] sm:$0xff]
        %v317 = vld [vmem:[%s314] sm:$0xff]
        %319 = vset.pattern.permute.xlu0 0
        %320 = vperm.xlu0 %319, %v315
        %v321 = vpop.permute.xlu0 %320
        %v323 = vmul.f32 %v321, %v316
        %324 = vset.pattern.permute.xlu0 1
        %325 = vperm.xlu0 %324, %v315
        %v326 = vpop.permute.xlu0 %325
        %v328 = vmul.f32 %v326, %v317
        %v329 = vadd.f32 %v323, %v328
        %330 = vst [vmem:[%s303] sm:$0xff] %v329
        %v331 = vld [vmem:[#allocation2] sm:$0xff]
        %332 = vset.pattern.permute.xlu0 2
        %333 = vperm.xlu0 %332, %v315
        %v334 = vpop.permute.xlu0 %333
        %vm336 = vcmask 64512
        %v338 = vsel %vm336, %v331, 0
        %340 = vmatprep.subr.mxu0 0.0
        %341 = vmatpush1.msra.mxu0 0.0
        %342 = vmatprep.subr.mxu0 0.0
        %343 = vmatpush1.msra.mxu0 0.0
        %344 = vmatprep.subr.mxu0 0.0
        %345 = vmatpush1.msra.mxu0 0.0
        %346 = vmatprep.subr.mxu0 0.0
        %347 = vmatpush1.msra.mxu0 0.0
        %348 = vmatprep.subr.mxu0 0.0
        %349 = vmatpush1.msra.mxu0 0.0
        %350 = vmatprep.subr.mxu0 0.0
        %351 = vmatpush1.msra.mxu0 0.0
        %352 = vmatprep.subr.mxu0 0.0
        %353 = vmatpush1.msra.mxu0 0.0
        %354 = vmatprep.subr.mxu0 0.0
        %355 = vmatpush1.msra.mxu0 0.0
        %356 = vmatprep.subr.mxu0 0.0
        %357 = vmatpush1.msra.mxu0 0.0
        %358 = vmatprep.subr.mxu0 0.0
        %359 = vmatpush1.msra.mxu0 0.0
        %360 = vmatprep.subr.mxu0 0.0
        %361 = vmatpush1.msra.mxu0 0.0
        %362 = vmatprep.subr.mxu0 0.0
        %363 = vmatpush1.msra.mxu0 0.0
        %364 = vmatprep.subr.mxu0 0.0
        %365 = vmatpush1.msra.mxu0 0.0
        %366 = vmatprep.subr.mxu0 0.0
        %367 = vmatpush1.msra.mxu0 0.0
        %368 = vmatprep.subr.mxu0 0.0
        %369 = vmatpush1.msra.mxu0 0.0
        %370 = vmatprep.subr.mxu0 0.0
        %371 = vmatpush1.msra.mxu0 %v329
        %372 = vmatprep.subr.mxu0 0.0
        %373 = vmatpush2.msra.mxu0 0.0
        %374 = vmatprep.subr.mxu0 0.0
        %375 = vmatpush2.msra.mxu0 0.0
        %376 = vmatprep.subr.mxu0 0.0
        %377 = vmatpush2.msra.mxu0 0.0
        %378 = vmatprep.subr.mxu0 0.0
        %379 = vmatpush2.msra.mxu0 0.0
        %380 = vmatprep.subr.mxu0 0.0
        %381 = vmatpush2.msra.mxu0 0.0
        %382 = vmatprep.subr.mxu0 0.0
        %383 = vmatpush2.msra.mxu0 0.0
        %384 = vmatprep.subr.mxu0 0.0
        %385 = vmatpush2.msra.mxu0 0.0
        %386 = vmatprep.subr.mxu0 0.0
        %387 = vmatpush2.msra.mxu0 0.0
        %388 = vmatprep.subr.mxu0 0.0
        %389 = vmatpush2.msra.mxu0 0.0
        %390 = vmatprep.subr.mxu0 0.0
        %391 = vmatpush2.msra.mxu0 0.0
        %392 = vmatprep.subr.mxu0 0.0
        %393 = vmatpush2.msra.mxu0 0.0
        %394 = vmatprep.subr.mxu0 0.0
        %395 = vmatpush2.msra.mxu0 0.0
        %396 = vmatprep.subr.mxu0 0.0
        %397 = vmatpush2.msra.mxu0 0.0
        %398 = vmatprep.subr.mxu0 0.0
        %399 = vmatpush2.msra.mxu0 0.0
        %400 = vmatprep.subr.mxu0 0.0
        %401 = vmatpush2.msra.mxu0 0.0
        %402 = vmatprep.subr.mxu0 0.0
        %403 = vmatpush2.msra.mxu0 0.0
        %404 = vmatprep.mubr.f32.mxu0 0.0
        %405 = vmatmul.mubr.f32.gmra.mxu0 %v338
        %v406 = vpop.f32.mrf.mxu0
        %v407 = vadd.f32 %v334, %v406
        %v408 = vpop.f32.mrf.mxu0
        %409 = vdwg.mxu0
        %410 = vst [vmem:[%s310] sm:$0xff] %v407
        %v411 = vsub.f32 %v407, %v317
        %v412 = vmul.f32 %v411, %v411
        %413 = vst [vmem:[%s296] sm:$0xff] %v412
        %s414 = sand.u32 %s130, 1
        %s415 = scalar_lea.sflag [#allocation4], %s414
        %s416 = sand.u32 %s130, 1
        %s417 = smul.addr %s416, 8
        %s418 = scalar_lea.vmem [#allocation7], %s417
        %s419 = sand.u32 %s28, 1
        %s420 = scalar_lea.sflag [#allocation9], %s419
        %s421 = sand.u32 %s156, 1
        %s422 = smul.addr %s421, 8
        %s423 = scalar_lea.vmem [#allocation8], %s422
        %s424 = sand.u32 %s28, 1
        %s425 = scalar_lea.sflag [#allocation9], %s424
        %s426 = sand.u32 %s182, 1
        %s427 = smul.addr %s426, 8
        %s428 = scalar_lea.vmem [#allocation10], %s427
        // Predicated region
        $region45: #{tpu_custom_call.1} parent=35 // pred_check
          %p429 = pneg %p140
        $region46: #{tpu_custom_call.1} parent=35 // pred_check_branch
          %431 = sbr.rel (%p429) target = $region48
        $region47: #{tpu_custom_call.1} parent=35 // pred_region
          %s433 = ssub.s32 128, 128
          %434 = vsyncadd %s415, %s433
          %s435 = smul.addr %s28, 128
          %s436 = scalar_lea.hbm %s4, %s435
          %s438 = sshll.u32 %s418, 4
          %s439 = int_to_ptr.vmem [resolvable:$true] %s438
          %441 = dma.vmem_to_hbm [thread:$0]  %s439, 128, %s436, %s415
        $region48: #{tpu_custom_call.1} parent=35 // pred_fallthru
          _
        // Predicated region
        $region49: #{tpu_custom_call.1} parent=35 // pred_check
          %p442 = pneg %p166
        $region50: #{tpu_custom_call.1} parent=35 // pred_check_branch
          %444 = sbr.rel (%p442) target = $region52
        $region51: #{tpu_custom_call.1} parent=35 // pred_region
          %s446 = ssub.s32 128, 128
          %447 = vsyncadd %s420, %s446
          %s448 = smul.addr %s28, 128
          %s449 = scalar_lea.hbm %s5, %s448
          %s451 = sshll.u32 %s423, 4
          %s452 = int_to_ptr.vmem [resolvable:$true] %s451
          %454 = dma.vmem_to_hbm [thread:$0]  %s452, 128, %s449, %s420
        $region52: #{tpu_custom_call.1} parent=35 // pred_fallthru
          _
        // Predicated region
        $region53: #{tpu_custom_call.1} parent=35 // pred_check
          %p455 = pneg %p192
        $region54: #{tpu_custom_call.1} parent=35 // pred_check_branch
          %457 = sbr.rel (%p455) target = $region56
        $region55: #{tpu_custom_call.1} parent=35 // pred_region
          %s459 = ssub.s32 128, 128
          %460 = vsyncadd %s425, %s459
          %s461 = smul.addr %s28, 128
          %s462 = scalar_lea.hbm %s6, %s461
          %s464 = sshll.u32 %s428, 4
          %s465 = int_to_ptr.vmem [resolvable:$true] %s464
          %467 = dma.vmem_to_hbm [thread:$0]  %s465, 128, %s462, %s425
        $region56: #{tpu_custom_call.1} parent=35 // pred_fallthru
          _
      $region36: #{tpu_custom_call.1} parent=5 // pred_fallthru
        _
      %p468 = scmp.le.s32.totalorder 2, %s23
      // Predicated region
      $region57: #{tpu_custom_call.1} parent=5 // pred_check
        %p469 = pneg %p468
      $region58: #{tpu_custom_call.1} parent=5 // pred_check_branch
        %471 = sbr.rel (%p469) target = $region60
      $region59: #{tpu_custom_call.1} parent=5 // pred_region
        %s472 = ssub.s32 %s23, 2
        // Predicated region
        $region61: #{tpu_custom_call.1} parent=59 // pred_check
          %p473 = pneg %p146
        $region62: #{tpu_custom_call.1} parent=59 // pred_check_branch
          %475 = sbr.rel (%p473) target = $region64
        $region63: #{tpu_custom_call.1} parent=59 // pred_region
          %s476 = sand.u32 %s131, 1
          %s477 = scalar_lea.sflag [#allocation4], %s476
          %s478 = sand.u32 %s131, 1
          %s479 = smul.addr %s478, 8
          %s480 = scalar_lea.vmem [#allocation7], %s479
          %481 = dma.done %s477, 128
        $region64: #{tpu_custom_call.1} parent=59 // pred_fallthru
          _
        // Predicated region
        $region65: #{tpu_custom_call.1} parent=59 // pred_check
          %p482 = pneg %p172
        $region66: #{tpu_custom_call.1} parent=59 // pred_check_branch
          %484 = sbr.rel (%p482) target = $region68
        $region67: #{tpu_custom_call.1} parent=59 // pred_region
          %s485 = sand.u32 %s29, 1
          %s486 = scalar_lea.sflag [#allocation9], %s485
          %s487 = sand.u32 %s157, 1
          %s488 = smul.addr %s487, 8
          %s489 = scalar_lea.vmem [#allocation8], %s488
          %490 = dma.done %s486, 128
        $region68: #{tpu_custom_call.1} parent=59 // pred_fallthru
          _
        // Predicated region
        $region69: #{tpu_custom_call.1} parent=59 // pred_check
          %p491 = pneg %p198
        $region70: #{tpu_custom_call.1} parent=59 // pred_check_branch
          %493 = sbr.rel (%p491) target = $region72
        $region71: #{tpu_custom_call.1} parent=59 // pred_region
          %s494 = sand.u32 %s29, 1
          %s495 = scalar_lea.sflag [#allocation9], %s494
          %s496 = sand.u32 %s183, 1
          %s497 = smul.addr %s496, 8
          %s498 = scalar_lea.vmem [#allocation10], %s497
          %499 = dma.done %s495, 128
        $region72: #{tpu_custom_call.1} parent=59 // pred_fallthru
          _
      $region60: #{tpu_custom_call.1} parent=5 // pred_fallthru
        _
    $region6: #{tpu_custom_call.1} parent=1 // loop_footer
      %s27 = sadd.s32 1, %s23
    $region7: #{tpu_custom_call.1} parent=1 // loop_footer_branch
      %22 = sbr.rel target = $region3
    $region8: #{tpu_custom_call.1} parent=1 // loop_exit
      _
    %500 = vsyncpa [#allocation3], 1
    %s501 = scalar_lea.sflag [#allocation3], 1
    %502 = vsyncpa %s501, 1
    %503 = vsyncpa [#allocation6], 1
    %s504 = scalar_lea.sflag [#allocation6], 1
    %505 = vsyncpa %s504, 1
    %506 = vsyncpa [#allocation4], 1
    %s507 = scalar_lea.sflag [#allocation4], 1
    %508 = vsyncpa %s507, 1
    %509 = vsyncpa [#allocation9], 1
    %s510 = scalar_lea.sflag [#allocation9], 1
    %511 = vsyncpa %s510, 1

</llo_original>
